<compile_context>
chip_gen: v7x
topology: tpu7x:2x2x1
jax: 0.10.0
libtpu: 0.0.40
codegen_flags: <defaults>
</compile_context>

<pallas_src>
import numpy as np
import jax
import jax.numpy as jnp
from jax.experimental import pallas as pl
from jax.experimental.pallas import tpu as pltpu


# ------------------------------------------------------------------ Pallas ---
def _iou_cost_kernel(tx0_ref, ty0_ref, tx1_ref, ty1_ref, p_ref, cost_ref):
    # target coords: (tn, 1) each, pre-split in the wrapper (no lane slices)
    tx0 = tx0_ref[...]
    ty0 = ty0_ref[...]
    tx1 = tx1_ref[...]
    ty1 = ty1_ref[...]

    # proposal coords: (4, tm) -> zero/sublane-offset slices, each (1, tm)
    px0 = p_ref[0:1, :]
    py0 = p_ref[1:2, :]
    px1 = p_ref[2:3, :]
    py1 = p_ref[3:4, :]

    area_t = (tx1 - tx0) * (ty1 - ty0)          # (tn, 1)
    area_p = (px1 - px0) * (py1 - py0)          # (1, tm)

    lt_x = jnp.maximum(tx0, px0)                # (tn, tm)
    lt_y = jnp.maximum(ty0, py0)
    rb_x = jnp.minimum(tx1, px1)
    rb_y = jnp.minimum(ty1, py1)

    # Fold the output sign into the intersection width: w_neg = -max(rb-lt, 0).
    w_neg = jnp.minimum(lt_x - rb_x, 0.0)       # (tn, tm), <= 0
    h = jnp.maximum(rb_y - lt_y, 0.0)           # (tn, tm), >= 0
    neg_inter = w_neg * h                       # = -intersection
    union = area_t + area_p + neg_inter         # = area_t + area_p - inter

    # Cheap zero-union guard (degenerate / zero-padded boxes): keeps NaN out of
    # the host LAP solver; for any real box pair union >> tiny so it is exact.
    safe_union = jnp.maximum(union, 1e-30)

    # Approx reciprocal runs on the (otherwise idle) EUP slot; one Newton step
    # restores near-exact parity with the torch reference divide.
    r = pl.reciprocal(safe_union, approx=True)
    r = r * (2.0 - safe_union * r)

    cost_ref[...] = neg_inter * r               # = -IoU  (cost_iou)


def _round_up(x, m):
    return ((x + m - 1) // m) * m


def _pick_tiles(n_pad, m_pad):
    # Output tile capped at 256x1024 f32 = 1 MiB (2 MiB double-buffered):
    # comfortable at default scoped VMEM limits on v5e/v6e (128 MiB) and
    # v7x (64 MiB physical).
    tile_n = min(256, n_pad)
    tile_m = min(1024, m_pad)
    # v7x has 2 TensorCores; make sure a "parallel" axis has >=2 grid steps
    # whenever there is enough work to split (no effect on single-TC v5e/v6e).
    if n_pad // tile_n == 1 and m_pad // tile_m == 1 and m_pad >= 256:
        tile_m = max(128, _round_up(m_pad // 2, 128))
    return tile_n, tile_m


@jax.jit
def _iou_cost_padded(target_bbox, proposal_bbox):
    """(N,4), (M,4) -> (N_pad, M_pad) f32 padded cost matrix (= -IoU).

    Padded rows/cols are zero-cost and are sliced away on the host before the
    LAP step. Jitted so pad / SoA split / transpose / pallas_call compile into
    a single executable (one dispatch).
    """
    n = target_bbox.shape[0]
    m = proposal_bbox.shape[0]

    n_pad = _round_up(max(n, 1), 8)
    m_pad = _round_up(max(m, 1), 128)
    tile_n, tile_m = _pick_tiles(n_pad, m_pad)
    n_pad = _round_up(n_pad, tile_n)
    m_pad = _round_up(m_pad, tile_m)

    target = target_bbox.astype(jnp.float32)
    proposal = proposal_bbox.astype(jnp.float32)

    # Zero-pad (padded boxes are zero-area -> cost forced to 0 in-kernel) and
    # re-layout once; all of this fuses under jit.
    t_pad = jnp.zeros((n_pad, 4), jnp.float32).at[:n, :].set(target)
    p_pad = jnp.zeros((m_pad, 4), jnp.float32).at[:m, :].set(proposal)

    tx0 = t_pad[:, 0:1]
    ty0 = t_pad[:, 1:2]
    tx1 = t_pad[:, 2:3]
    ty1 = t_pad[:, 3:4]
    p_t = jnp.transpose(p_pad)                  # (4, M_pad)

    grid = (n_pad // tile_n, m_pad // tile_m)
    t_spec = pl.BlockSpec((tile_n, 1), lambda i, j: (i, 0))

    cost_pad = pl.pallas_call(
        _iou_cost_kernel,
        out_shape=jax.ShapeDtypeStruct((n_pad, m_pad), jnp.float32),
        grid=grid,
        in_specs=[
            t_spec, t_spec, t_spec, t_spec,
            pl.BlockSpec((4, tile_m), lambda i, j: (0, j)),
        ],
        out_specs=pl.BlockSpec((tile_n, tile_m), lambda i, j: (i, j)),
        compiler_params=pltpu.CompilerParams(
            dimension_semantics=("parallel", "parallel")),
        cost_estimate=pl.CostEstimate(
            flops=17 * n_pad * m_pad,
            transcendentals=n_pad * m_pad,
            bytes_accessed=4 * (n_pad * m_pad + 4 * n_pad + 4 * m_pad)),
    )(tx0, ty0, tx1, ty1, p_t)

    return cost_pad


def iou_cost_matrix(target_bbox, proposal_bbox):
    """Convenience helper: (N,4), (M,4) -> (N,M) numpy f64 cost matrix."""
    n = target_bbox.shape[0]
    m = proposal_bbox.shape[0]
    cost_pad = jax.block_until_ready(_iou_cost_padded(target_bbox, proposal_bbox))
    # Host-side slice of the padded result (free; avoids an extra device pass).
    return np.asarray(cost_pad)[:n, :m].astype(np.float64)


# -------------------------------------------------- host-side LAP (lapjv) ----
# TODO(synk): lap.lapjv is an inherently sequential combinatorial solver with
# no clean Pallas equivalent; it is reproduced host-side in numpy (same
# extend_cost + cost_limit matrix extension semantics as the `lap` package).
def _solve_square_lap(cost):
    """Optimal assignment on a square cost matrix (shortest augmenting path)."""
    n = cost.shape[0]
    INF = np.inf
    u = np.zeros(n + 1, dtype=np.float64)
    v = np.zeros(n + 1, dtype=np.float64)
    p = np.zeros(n + 1, dtype=np.int64)     # p[j] = row (1-based) assigned to col j
    way = np.zeros(n + 1, dtype=np.int64)

    for i in range(1, n + 1):
        p[0] = i
        j0 = 0
        minv = np.full(n + 1, INF, dtype=np.float64)
        used = np.zeros(n + 1, dtype=bool)
        while True:
            used[j0] = True
            i0 = p[j0]
            delta = INF
            j1 = -1
            for j in range(1, n + 1):
                if not used[j]:
                    cur = cost[i0 - 1, j - 1] - u[i0] - v[j]
                    if cur < minv[j]:
                        minv[j] = cur
                        way[j] = j0
                    if minv[j] < delta:
                        delta = minv[j]
                        j1 = j
            for j in range(n + 1):
                if used[j]:
                    u[p[j]] += delta
                    v[j] -= delta
                else:
                    minv[j] -= delta
            j0 = j1
            if p[j0] == 0:
                break
        while True:
            j1 = way[j0]
            p[j0] = p[j1]
            j0 = j1
            if j0 == 0:
                break

    x = np.full(n, -1, dtype=np.int64)
    y = np.full(n, -1, dtype=np.int64)
    for j in range(1, n + 1):
        if p[j] != 0:
            x[p[j] - 1] = j - 1
            y[j - 1] = p[j] - 1
    return x, y


def _lapjv_with_cost_limit(C, cost_limit):
    """Reproduces lap.lapjv(C, cost_limit=..., extend_cost=True) row/col output."""
    n, m = C.shape
    ext = np.full((n + m, n + m), cost_limit / 2.0, dtype=np.float64)
    ext[n:, m:] = 0.0
    ext[:n, :m] = C
    x_ext, y_ext = _solve_square_lap(ext)
    row = x_ext[:n].copy()
    col = y_ext[:m].copy()
    row[row >= m] = -1
    col[col >= n] = -1
    return row.astype(np.int64), col.astype(np.int64)


# ------------------------------------------------------------------ module ---
class HungarianMatcher:
    def __init__(self, iou_threshold=0.5):
        self.iou_threshold = iou_threshold

    def __call__(self, target_bbox, proposal_bbox):
        n = target_bbox.shape[0]
        m = proposal_bbox.shape[0]
        # Single jitted device program (pad + layout + Pallas kernel), then
        # host-side slice of the padded cost before the LAP extension copies.
        cost_pad = jax.block_until_ready(
            _iou_cost_padded(jnp.asarray(target_bbox, jnp.float32),
                             jnp.asarray(proposal_bbox, jnp.float32)))
        C = np.asarray(cost_pad)[:n, :m].astype(np.float64)
        row, col = _lapjv_with_cost_limit(C, cost_limit=-self.iou_threshold)
        return row, col   # int64, matching torch.int64 outputs


# -------------------------------------------------------------------- main ---
if __name__ == "__main__":
    key = jax.random.PRNGKey(0)
    k1, k2, k3, k4 = jax.random.split(key, 4)

    N, M = 8, 16  # num_target_boxes, num_proposal_boxes

    # Build valid [x0, y0, x1, y1] boxes deterministically.
    t_xy = jax.random.uniform(k1, (N, 2), minval=0.0, maxval=0.5)
    t_wh = jax.random.uniform(k2, (N, 2), minval=0.1, maxval=0.5)
    target_bbox = jnp.concatenate([t_xy, t_xy + t_wh], axis=-1).astype(jnp.float32)

    p_xy = jax.random.uniform(k3, (M, 2), minval=0.0, maxval=0.5)
    p_wh = jax.random.uniform(k4, (M, 2), minval=0.1, maxval=0.5)
    proposal_bbox = jnp.concatenate([p_xy, p_xy + p_wh], axis=-1).astype(jnp.float32)

    matcher = HungarianMatcher(iou_threshold=0.5)
    row, col = matcher(target_bbox, proposal_bbox)

    assert row.shape == (N,) and row.dtype == np.int64
    assert col.shape == (M,) and col.dtype == np.int64
    print("KERNEL_OK")
</pallas_src>

<mosaic_0001>
module attributes {stable_mosaic.version = 11 : i64} {
  func.func @_iou_cost_kernel(%arg0: i32, %arg1: i32, %arg2: memref<8x1xf32, #tpu.memory_space<vmem>>, %arg3: memref<8x1xf32, #tpu.memory_space<vmem>>, %arg4: memref<8x1xf32, #tpu.memory_space<vmem>>, %arg5: memref<8x1xf32, #tpu.memory_space<vmem>>, %arg6: memref<4x128xf32, #tpu.memory_space<vmem>>, %arg7: memref<8x128xf32, #tpu.memory_space<vmem>>) attributes {dimension_semantics = [#tpu.dimension_semantics<parallel>, #tpu.dimension_semantics<parallel>], iteration_bounds = array<i64: 1, 1>, scalar_prefetch = 0 : i64, scratch_operands = 0 : i64, tpu.core_type = #tpu.core_type<tc>, window_params = [{transform_indices = @transform_0, window_bounds = array<i64: 8, 1>}, {transform_indices = @transform_1, window_bounds = array<i64: 8, 1>}, {transform_indices = @transform_2, window_bounds = array<i64: 8, 1>}, {transform_indices = @transform_3, window_bounds = array<i64: 8, 1>}, {transform_indices = @transform_4, window_bounds = array<i64: 4, 128>}, {transform_indices = @transform_5, window_bounds = array<i64: 8, 128>}]} {
    %c0 = arith.constant 0 : index
    %c0_0 = arith.constant 0 : index
    %0 = vector.load %arg2[%c0, %c0_0] : memref<8x1xf32, #tpu.memory_space<vmem>>, vector<8x1xf32>
    %c0_1 = arith.constant 0 : index
    %c0_2 = arith.constant 0 : index
    %1 = vector.load %arg3[%c0_1, %c0_2] : memref<8x1xf32, #tpu.memory_space<vmem>>, vector<8x1xf32>
    %c0_3 = arith.constant 0 : index
    %c0_4 = arith.constant 0 : index
    %2 = vector.load %arg4[%c0_3, %c0_4] : memref<8x1xf32, #tpu.memory_space<vmem>>, vector<8x1xf32>
    %c0_5 = arith.constant 0 : index
    %c0_6 = arith.constant 0 : index
    %3 = vector.load %arg5[%c0_5, %c0_6] : memref<8x1xf32, #tpu.memory_space<vmem>>, vector<8x1xf32>
    %c0_7 = arith.constant 0 : index
    %c0_8 = arith.constant 0 : index
    %4 = vector.load %arg6[%c0_7, %c0_8] : memref<4x128xf32, #tpu.memory_space<vmem>>, vector<1x128xf32>
    %c1 = arith.constant 1 : index
    %c0_9 = arith.constant 0 : index
    %5 = vector.load %arg6[%c1, %c0_9] : memref<4x128xf32, #tpu.memory_space<vmem>>, vector<1x128xf32>
    %c2 = arith.constant 2 : index
    %c0_10 = arith.constant 0 : index
    %6 = vector.load %arg6[%c2, %c0_10] : memref<4x128xf32, #tpu.memory_space<vmem>>, vector<1x128xf32>
    %c3 = arith.constant 3 : index
    %c0_11 = arith.constant 0 : index
    %7 = vector.load %arg6[%c3, %c0_11] : memref<4x128xf32, #tpu.memory_space<vmem>>, vector<1x128xf32>
    %8 = arith.subf %2, %0 : vector<8x1xf32>
    %9 = arith.subf %3, %1 : vector<8x1xf32>
    %10 = arith.mulf %8, %9 : vector<8x1xf32>
    %11 = arith.subf %6, %4 : vector<1x128xf32>
    %12 = arith.subf %7, %5 : vector<1x128xf32>
    %13 = arith.mulf %11, %12 : vector<1x128xf32>
    %14 = vector.broadcast %0 : vector<8x1xf32> to vector<8x128xf32>
    %15 = vector.broadcast %4 : vector<1x128xf32> to vector<8x128xf32>
    %16 = arith.maximumf %14, %15 : vector<8x128xf32>
    %17 = vector.broadcast %1 : vector<8x1xf32> to vector<8x128xf32>
    %18 = vector.broadcast %5 : vector<1x128xf32> to vector<8x128xf32>
    %19 = arith.maximumf %17, %18 : vector<8x128xf32>
    %20 = vector.broadcast %2 : vector<8x1xf32> to vector<8x128xf32>
    %21 = vector.broadcast %6 : vector<1x128xf32> to vector<8x128xf32>
    %22 = arith.minimumf %20, %21 : vector<8x128xf32>
    %23 = vector.broadcast %3 : vector<8x1xf32> to vector<8x128xf32>
    %24 = vector.broadcast %7 : vector<1x128xf32> to vector<8x128xf32>
    %25 = arith.minimumf %23, %24 : vector<8x128xf32>
    %26 = arith.subf %16, %22 : vector<8x128xf32>
    %cst = arith.constant 0.000000e+00 : f32
    %27 = vector.broadcast %cst : f32 to vector<8x128xf32>
    %28 = arith.minimumf %26, %27 : vector<8x128xf32>
    %29 = arith.subf %25, %19 : vector<8x128xf32>
    %cst_12 = arith.constant 0.000000e+00 : f32
    %30 = vector.broadcast %cst_12 : f32 to vector<8x128xf32>
    %31 = arith.maximumf %29, %30 : vector<8x128xf32>
    %32 = arith.mulf %28, %31 : vector<8x128xf32>
    %33 = vector.broadcast %10 : vector<8x1xf32> to vector<8x128xf32>
    %34 = vector.broadcast %13 : vector<1x128xf32> to vector<8x128xf32>
    %35 = arith.addf %33, %34 : vector<8x128xf32>
    %36 = arith.addf %35, %32 : vector<8x128xf32>
    %cst_13 = arith.constant 1.000000e-30 : f32
    %37 = vector.broadcast %cst_13 : f32 to vector<8x128xf32>
    %38 = arith.maximumf %36, %37 : vector<8x128xf32>
    %39 = tpu.reciprocal %38 {approx = true} : vector<8x128xf32> -> vector<8x128xf32>
    %40 = arith.mulf %38, %39 : vector<8x128xf32>
    %cst_14 = arith.constant 2.000000e+00 : f32
    %41 = vector.broadcast %cst_14 : f32 to vector<8x128xf32>
    %42 = arith.subf %41, %40 : vector<8x128xf32>
    %43 = arith.mulf %39, %42 : vector<8x128xf32>
    %44 = arith.mulf %32, %43 : vector<8x128xf32>
    %c0_15 = arith.constant 0 : index
    %c0_16 = arith.constant 0 : index
    %45 = vector.load %arg7[%c0_15, %c0_16] : memref<8x128xf32, #tpu.memory_space<vmem>>, vector<8x128xf32>
    tpu.vector_store %arg7[%c0_15, %c0_16], %44 {strides = array<i32>} : memref<8x128xf32, #tpu.memory_space<vmem>>, vector<8x128xf32>,
    return
  }
  func.func @transform_0(%arg0: i32, %arg1: i32) -> (i32, i32) {
    %c0_i32 = arith.constant 0 : i32
    %c0_i32_0 = arith.constant 0 : i32
    return %arg0, %c0_i32 : i32, i32
  }
  func.func @transform_1(%arg0: i32, %arg1: i32) -> (i32, i32) {
    %c0_i32 = arith.constant 0 : i32
    %c0_i32_0 = arith.constant 0 : i32
    return %arg0, %c0_i32 : i32, i32
  }
  func.func @transform_2(%arg0: i32, %arg1: i32) -> (i32, i32) {
    %c0_i32 = arith.constant 0 : i32
    %c0_i32_0 = arith.constant 0 : i32
    return %arg0, %c0_i32 : i32, i32
  }
  func.func @transform_3(%arg0: i32, %arg1: i32) -> (i32, i32) {
    %c0_i32 = arith.constant 0 : i32
    %c0_i32_0 = arith.constant 0 : i32
    return %arg0, %c0_i32 : i32, i32
  }
  func.func @transform_4(%arg0: i32, %arg1: i32) -> (i32, i32) {
    %c0_i32 = arith.constant 0 : i32
    %c0_i32_0 = arith.constant 0 : i32
    return %c0_i32, %arg1 : i32, i32
  }
  func.func @transform_5(%arg0: i32, %arg1: i32) -> (i32, i32) {
    %c0_i32 = arith.constant 0 : i32
    return %arg0, %arg1 : i32, i32
  }
}

</mosaic_0001>

<llo_original>
// kernel: _iou_cost_padded.1
$region0: #{_iou_cost_padded.1}
  #allocation0 [shape = 'u32[]', space=smem, size = 0x4, offset = 0x4, fixed_abs, tag = 'smem constant byte address 0x4 - core index']
  #allocation1 [shape = 'u32[144,128]{1,0:T(1,128)}', space=vmem, size = 0x12000, scoped, tag = 'internal scratch']
  %s0 = inlined_call_operand.vmem [shape: f32[8,1], index: 0, kind: input, shape index: {}]
  %s1 = inlined_call_operand.vmem [shape: f32[8,1], index: 1, kind: input, shape index: {}]
  %s2 = inlined_call_operand.vmem [shape: f32[8,1], index: 2, kind: input, shape index: {}]
  %s3 = inlined_call_operand.vmem [shape: f32[8,1], index: 3, kind: input, shape index: {}]
  %s4 = inlined_call_operand.vmem [shape: f32[4,128], index: 4, kind: input, shape index: {}]
  %s5 = inlined_call_operand.hbm [shape: f32[8,128], index: 5, kind: output, shape index: {}]
  %s6 = sld [smem:[#allocation0]]
  $region30: #{_iou_cost_padded.1} parent=0
    _
  %s8 = ssub.s32 1, %s6
  %s9 = scalar_select 0, %s8, %s6
  $region1: #{_iou_cost_padded.1} parent=0
    #allocation2 [shape = 'u8[4096]{0}', space=vmem, size = 0x1000, scoped, tag = 'output window, operand 0, single buffered']
    #allocation3 [shape = 's32[1]{0}', space=sflag, size = 0x4, scoped, tag = 'scoped memory for _iou_cost_padded.1']
    %10 = vsyncpa [#allocation3], 0
    // Predicated region
    $region2: #{_iou_cost_padded.1} parent=1 // pred_check
      _
    $region3: #{_iou_cost_padded.1} parent=1 // pred_check_branch
      %12 = sbr.rel (0) target = $region5
    $region4: #{_iou_cost_padded.1} parent=1 // pred_region
      _
    $region5: #{_iou_cost_padded.1} parent=1 // pred_fallthru
      _
    // Predicated region
    $region6: #{_iou_cost_padded.1} parent=1 // pred_check
      _
    $region7: #{_iou_cost_padded.1} parent=1 // pred_check_branch
      %14 = sbr.rel (0) target = $region9
    $region8: #{_iou_cost_padded.1} parent=1 // pred_region
      _
    $region9: #{_iou_cost_padded.1} parent=1 // pred_fallthru
      _
    // Predicated region
    $region10: #{_iou_cost_padded.1} parent=1 // pred_check
      _
    $region11: #{_iou_cost_padded.1} parent=1 // pred_check_branch
      %16 = sbr.rel (0) target = $region13
    $region12: #{_iou_cost_padded.1} parent=1 // pred_region
      _
    $region13: #{_iou_cost_padded.1} parent=1 // pred_fallthru
      _
    // Predicated region
    $region14: #{_iou_cost_padded.1} parent=1 // pred_check
      _
    $region15: #{_iou_cost_padded.1} parent=1 // pred_check_branch
      %18 = sbr.rel (0) target = $region17
    $region16: #{_iou_cost_padded.1} parent=1 // pred_region
      _
    $region17: #{_iou_cost_padded.1} parent=1 // pred_fallthru
      _
    // Predicated region
    $region18: #{_iou_cost_padded.1} parent=1 // pred_check
      _
    $region19: #{_iou_cost_padded.1} parent=1 // pred_check_branch
      %20 = sbr.rel (0) target = $region21
    $region20: #{_iou_cost_padded.1} parent=1 // pred_region
      _
    $region21: #{_iou_cost_padded.1} parent=1 // pred_fallthru
      _
    %v21 = vld [vmem:[%s0] sm:$0xff]
    %v22 = vld [vmem:[%s1] sm:$0xff]
    %v23 = vld [vmem:[%s2] sm:$0xff]
    %v24 = vld [vmem:[%s3] sm:$0xff]
    %v25 = vld [vmem:[%s4] sm:$0x1]
    %v26 = vld [vmem:[%s4 + $0x1] sm:$0x1]
    %v27 = vld [vmem:[%s4 + $0x2] sm:$0x1]
    %v28 = vld [vmem:[%s4 + $0x3] sm:$0x1]
    %v29 = vsub.f32 %v23, %v21
    %v30 = vsub.f32 %v24, %v22
    %v31 = vmul.f32 %v29, %v30
    %v32 = vsub.f32 %v27, %v25
    %v33 = vsub.f32 %v28, %v26
    %v34 = vmul.f32 %v32, %v33
    %36 = vset.pattern.permute.xlu0 0
    %37 = vperm.xlu0 %36, %v21
    %v38 = vpop.permute.xlu0 %37
    %v40 = vlaneseq
    %v41 = vshrl.u32 %v40, 7
    %v42 = vsub.s32 0, %v41
    %v43 = vrot.slane %v25, %v42
    %v44 = vmax.f32 %v38, %v43
    %46 = vset.pattern.permute.xlu0 0
    %47 = vperm.xlu0 %46, %v22
    %v48 = vpop.permute.xlu0 %47
    %v50 = vlaneseq
    %v51 = vshrl.u32 %v50, 7
    %v52 = vsub.s32 0, %v51
    %v53 = vrot.slane %v26, %v52
    %v54 = vmax.f32 %v48, %v53
    %56 = vset.pattern.permute.xlu0 0
    %57 = vperm.xlu0 %56, %v23
    %v58 = vpop.permute.xlu0 %57
    %v60 = vlaneseq
    %v61 = vshrl.u32 %v60, 7
    %v62 = vsub.s32 0, %v61
    %v63 = vrot.slane %v27, %v62
    %v64 = vmin.f32 %v58, %v63
    %66 = vset.pattern.permute.xlu0 0
    %67 = vperm.xlu0 %66, %v24
    %v68 = vpop.permute.xlu0 %67
    %v70 = vlaneseq
    %v71 = vshrl.u32 %v70, 7
    %v72 = vsub.s32 0, %v71
    %v73 = vrot.slane %v28, %v72
    %v74 = vmin.f32 %v68, %v73
    %v75 = vsub.f32 %v44, %v64
    %v76 = vmin.f32 %v75, 0.0
    %v77 = vsub.f32 %v74, %v54
    %v78 = vmax.f32 %v77, 0.0
    %v79 = vmul.f32 %v76, %v78
    %81 = vset.pattern.permute.xlu0 0
    %82 = vperm.xlu0 %81, %v31
    %v83 = vpop.permute.xlu0 %82
    %v85 = vlaneseq
    %v86 = vshrl.u32 %v85, 7
    %v87 = vsub.s32 0, %v86
    %v88 = vrot.slane %v34, %v87
    %v89 = vadd.f32 %v83, %v88
    %v90 = vadd.f32 %v89, %v79
    %v91 = vmax.f32 %v90, 1e-30
    %v92 = vrcp.pop %v91
    %v93 = vmul.f32 %v91, %v92
    %v94 = vsub.f32 2.0, %v93
    %v95 = vmul.f32 %v92, %v94
    %v96 = vmul.f32 %v79, %v95
    %97 = vst [vmem:[#allocation2] sm:$0xff] %v96
    // Predicated region
    $region22: #{_iou_cost_padded.1} parent=1 // pred_check
      _
    $region23: #{_iou_cost_padded.1} parent=1 // pred_check_branch
      %99 = sbr.rel (0) target = $region25
    $region24: #{_iou_cost_padded.1} parent=1 // pred_region
      %s101 = ssub.s32 128, 128
      %102 = vsyncadd [#allocation3], %s101
      %s104 = sshll.u32 [#allocation2], 4
      %s105 = int_to_ptr.vmem [resolvable:$true] %s104
      %107 = dma.vmem_to_hbm [thread:$0]  %s105, 128, %s5, [#allocation3]
    $region25: #{_iou_cost_padded.1} parent=1 // pred_fallthru
      _
    // Predicated region
    $region26: #{_iou_cost_padded.1} parent=1 // pred_check
      _
    $region27: #{_iou_cost_padded.1} parent=1 // pred_check_branch
      %109 = sbr.rel (0) target = $region29
    $region28: #{_iou_cost_padded.1} parent=1 // pred_region
      %110 = dma.done [#allocation3], 128
    $region29: #{_iou_cost_padded.1} parent=1 // pred_fallthru
      _
    %111 = vsyncpa [#allocation3], 1

</llo_original>
